<compile_context>
chip_gen: v5e
topology: v5e:2x2
jax: 0.10.0
libtpu: 0.0.40
codegen_flags: <defaults>
</compile_context>

<pallas_src>
import functools

import jax
import jax.numpy as jnp
from jax import lax
from jax.experimental import pallas as pl
from jax.experimental.pallas import tpu as pltpu


def channel_attention_kernel(x_ref, w1_ref, w2_ref, out_ref, sum_acc, max_acc,
                             *, inv_hw, hw_total, hw_block, chunk, needs_mask):
    """One (batch-element, hw-block) grid step.

    x_ref   : (1, C, hw_block)  native dtype  input block (lane-dense over H*W)
    w1_ref  : (C, Cr)  f32      fc1 weight as a matmul matrix (no bias)
    w2_ref  : (Cr, C)  f32      fc2 weight as a matmul matrix (no bias)
    out_ref : (1, C, 1) f32     sigmoid gate for this batch element
    sum_acc : (C, chunk) f32    lane-resident running spatial sum  (VMEM)
    max_acc : (C, chunk) f32    lane-resident running spatial max  (VMEM)
    """
    j = pl.program_id(1)
    n_hw = pl.num_programs(1)
    n_chunks = hw_block // chunk
    unroll = n_chunks if n_chunks <= 8 else 8

    @pl.when(j == 0)
    def _():
        sum_acc[...] = jnp.zeros_like(sum_acc)
        max_acc[...] = jnp.full(max_acc.shape, -jnp.inf, dtype=max_acc.dtype)

    def accumulate(masked):
        if masked:
            # Hoisted out of the chunk loop (JAX does not CSE broadcasts).
            lane_idx = lax.broadcasted_iota(jnp.int32, (1, chunk), 1)
            base = j * hw_block

        def body(c, carry):
            off = pl.multiple_of(c * chunk, chunk)
            xb = x_ref[0, :, pl.ds(off, chunk)].astype(jnp.float32)  # (C, chunk)
            if masked:
                valid = (base + off + lane_idx) < hw_total           # (1, chunk)
                xs = jnp.where(valid, xb, 0.0)
                xm = jnp.where(valid, xb, -jnp.inf)
            else:
                xs = xb
                xm = xb
            sum_acc[...] = sum_acc[...] + xs
            max_acc[...] = jnp.maximum(max_acc[...], xm)
            return carry

        lax.fori_loop(0, n_chunks, body, 0, unroll=unroll)

    if needs_mask:
        # Only the last hw-block has a padded tail; keep the common path lean.
        @pl.when(j == n_hw - 1)
        def _():
            accumulate(True)

        @pl.when(j != n_hw - 1)
        def _():
            accumulate(False)
    else:
        accumulate(False)

    # Finalize: single cross-lane reduce + tiny SE-MLP + sigmoid gate.
    @pl.when(j == n_hw - 1)
    def _():
        avg = jnp.sum(sum_acc[...], axis=-1, keepdims=True) * inv_hw   # (C, 1)
        mxv = jnp.max(max_acc[...], axis=-1, keepdims=True)            # (C, 1)
        pooled = jnp.concatenate([avg, mxv], axis=1)                   # (C, 2)
        # fc1 / fc2 on both pooled vectors with one matmul per layer,
        # contracting on dim 0 so no transposes are needed.
        dn = (((0,), (0,)), ((), ()))
        h = jnp.maximum(
            lax.dot_general(w1_ref[...], pooled, dn,
                            preferred_element_type=jnp.float32), 0.0)  # (Cr, 2)
        y = lax.dot_general(w2_ref[...], h, dn,
                            preferred_element_type=jnp.float32)        # (C, 2)
        gate = jax.nn.sigmoid(y[:, 0:1] + y[:, 1:2])                   # (C, 1)
        out_ref[0] = gate.astype(out_ref.dtype)


def _round_up(x, m):
    return (x + m - 1) // m * m


def _plan_blocks(C, HW, itemsize, budget_bytes):
    """Pick (hw_block, chunk, needs_mask).

    hw_block is a multiple of 128 (or the full H*W extent when H*W < 128),
    sized so one (C, hw_block) input block stays within budget_bytes.
    chunk is the inner accumulation width for the lane-resident accumulators.
    """
    if HW <= 128:
        return HW, HW, False
    max_block = max(128, (budget_bytes // (C * itemsize)) // 128 * 128)
    hw_block = min(_round_up(HW, 128), max_block)
    n_hw = -(-HW // hw_block)
    needs_mask = (n_hw * hw_block != HW)
    if hw_block % 512 == 0:
        chunk = 512
    elif hw_block % 256 == 0:
        chunk = 256
    else:
        chunk = 128
    return hw_block, chunk, needs_mask


def channel_attention_forward(x_nchw, w1, w2, *, budget_bytes=8 * 1024 * 1024):
    """x_nchw: (N, C, H, W) any float dtype (streamed natively, e.g. bf16);
    w1: (C, C//ratio); w2: (C//ratio, C).

    Returns the (N, C, 1, 1) f32 sigmoid attention gate (the PyTorch module's
    forward output).
    """
    N, C, H, W = x_nchw.shape
    HW = H * W
    Cr = w1.shape[1]
    x3 = x_nchw.reshape(N, C, HW)        # contiguous reshape, no transpose
    itemsize = x3.dtype.itemsize

    hw_block, chunk, needs_mask = _plan_blocks(C, HW, itemsize, budget_bytes)
    n_hw = pl.cdiv(HW, hw_block)
    grid = (N, n_hw)

    w1f = w1.astype(jnp.float32)
    w2f = w2.astype(jnp.float32)

    # VMEM: double-buffered input block + lane-resident f32 accumulators
    # (+ weights/output, which are tiny).  Cap well below v7x's 64 MiB.
    in_block_bytes = C * hw_block * itemsize
    scratch_bytes = 2 * C * chunk * 4
    vmem_limit = 2 * in_block_bytes + scratch_bytes + 1024 * 1024
    vmem_limit = int(min(max(vmem_limit, 8 * 1024 * 1024), 48 * 1024 * 1024))

    cost = pl.CostEstimate(
        flops=int(N * (2 * C * HW + 8 * C * Cr)),
        transcendentals=int(N * C),
        bytes_accessed=int(N * C * HW * itemsize + N * C * 4
                           + 4 * (C * Cr + Cr * C)),
    )

    # TODO(synk): on v7x with N == 1 only one TensorCore is used; splitting the
    # spatial reduction across cores (leading parallel axis of size 2 writing
    # per-core partial sum/max, combined in a micro-kernel) would recover ~2x.
    out = pl.pallas_call(
        functools.partial(channel_attention_kernel,
                          inv_hw=1.0 / HW, hw_total=HW, hw_block=hw_block,
                          chunk=chunk, needs_mask=needs_mask),
        out_shape=jax.ShapeDtypeStruct((N, C, 1), jnp.float32),
        grid_spec=pltpu.PrefetchScalarGridSpec(
            num_scalar_prefetch=0,
            grid=grid,
            in_specs=[
                pl.BlockSpec((1, C, hw_block), lambda n, j: (n, 0, j)),
                pl.BlockSpec((C, Cr), lambda n, j: (0, 0)),
                pl.BlockSpec((Cr, C), lambda n, j: (0, 0)),
            ],
            out_specs=pl.BlockSpec((1, C, 1), lambda n, j: (n, 0, 0)),
            scratch_shapes=[pltpu.VMEM((C, chunk), jnp.float32),
                            pltpu.VMEM((C, chunk), jnp.float32)],
        ),
        compiler_params=pltpu.CompilerParams(
            dimension_semantics=("parallel", "arbitrary"),
            vmem_limit_bytes=vmem_limit),
        cost_estimate=cost,
    )(x3, w1f, w2f)

    return out.reshape(N, C, 1, 1)


# ----------------------------- pure-JAX reference -----------------------------
def reference_forward(x_nchw, w1, w2):
    x = x_nchw.astype(jnp.float32)
    avg = jnp.mean(x, axis=(2, 3))          # (N, C)
    mx = jnp.max(x, axis=(2, 3))            # (N, C)

    def mlp(p):
        return jnp.maximum(p @ w1, 0.0) @ w2

    return jax.nn.sigmoid(mlp(avg) + mlp(mx))[:, :, None, None]


if __name__ == "__main__":
    # ChannelAttention(in_channels=64, ratio=16): channels must be >= ratio.
    N, C, RATIO = 2, 64, 16
    CR = C // RATIO  # 4

    key = jax.random.PRNGKey(0)
    kx1, kx2, k1, k2 = jax.random.split(key, 4)

    # PyTorch fc1.weight (Cr, C, 1, 1) / fc2.weight (C, Cr, 1, 1) stored
    # transposed as plain matmul matrices (bias=False in the module).
    w1 = 0.2 * jax.random.normal(k1, (C, CR), jnp.float32)
    w2 = 0.2 * jax.random.normal(k2, (CR, C), jnp.float32)

    # Case 1: f32 input, H*W a multiple of 128 -> single unmasked block.
    x1 = jax.random.normal(kx1, (N, C, 16, 16), jnp.float32)
    out1 = jax.block_until_ready(channel_attention_forward(x1, w1, w2))
    ref1 = jax.block_until_ready(reference_forward(x1, w1, w2))
    assert out1.shape == (N, C, 1, 1)
    err1 = float(jnp.max(jnp.abs(out1 - ref1)))
    assert jnp.allclose(out1, ref1, rtol=1e-4, atol=1e-4), err1

    # Case 2: bf16 streaming input, odd H*W (17x17 = 289) and a tiny block
    # budget so the multi-block accumulate + masked-tail path is exercised.
    x2 = jax.random.normal(kx2, (N, C, 17, 17), jnp.float32).astype(jnp.bfloat16)
    out2 = jax.block_until_ready(
        channel_attention_forward(x2, w1, w2, budget_bytes=32 * 1024))
    ref2 = jax.block_until_ready(reference_forward(x2.astype(jnp.float32), w1, w2))
    assert out2.shape == (N, C, 1, 1)
    err2 = float(jnp.max(jnp.abs(out2 - ref2)))
    assert jnp.allclose(out2, ref2, rtol=1e-3, atol=1e-3), err2

    print("KERNEL_OK")
</pallas_src>

<mosaic_0001>
module attributes {stable_mosaic.version = 11 : i64} {
  func.func @channel_attention_kernel(%arg0: i32, %arg1: i32, %arg2: memref<1x64x256xf32, #tpu.memory_space<vmem>>, %arg3: memref<64x4xf32, #tpu.memory_space<vmem>>, %arg4: memref<4x64xf32, #tpu.memory_space<vmem>>, %arg5: memref<1x64x1xf32, #tpu.memory_space<vmem>>, %arg6: memref<64x256xf32, #tpu.memory_space<vmem>>, %arg7: memref<64x256xf32, #tpu.memory_space<vmem>>) attributes {dimension_semantics = [#tpu.dimension_semantics<parallel>, #tpu.dimension_semantics<arbitrary>], iteration_bounds = array<i64: 2, 1>, scalar_prefetch = 0 : i64, scratch_operands = 2 : i64, tpu.core_type = #tpu.core_type<tc>, window_params = [{transform_indices = @transform_0, window_bounds = array<i64: 1, 64, 256>}, {pipeline_mode = #tpu.pipeline_mode<synchronous>, transform_indices = @transform_1, window_bounds = array<i64: 64, 4>}, {pipeline_mode = #tpu.pipeline_mode<synchronous>, transform_indices = @transform_2, window_bounds = array<i64: 4, 64>}, {transform_indices = @transform_3, window_bounds = array<i64: 1, 64, 1>}]} {
    %c0_i32 = arith.constant 0 : i32
    %0 = arith.cmpi eq, %arg1, %c0_i32 : i32
    %1 = arith.extui %0 : i1 to i32
    %c0_i32_0 = arith.constant 0 : i32
    %2 = arith.cmpi ne, %1, %c0_i32_0 : i32
    scf.if %2 {
      %cst = arith.constant 0.000000e+00 : f32
      %17 = vector.broadcast %cst : f32 to vector<64x256xf32>
      %c0_13 = arith.constant 0 : index
      %c0_14 = arith.constant 0 : index
      %18 = vector.load %arg6[%c0_13, %c0_14] : memref<64x256xf32, #tpu.memory_space<vmem>>, vector<64x256xf32>
      tpu.vector_store %arg6[%c0_13, %c0_14], %17 {strides = array<i32>} : memref<64x256xf32, #tpu.memory_space<vmem>>, vector<64x256xf32>,
      %cst_15 = arith.constant 0xFF800000 : f32
      %19 = vector.broadcast %cst_15 : f32 to vector<64x256xf32>
      %c0_16 = arith.constant 0 : index
      %c0_17 = arith.constant 0 : index
      %20 = vector.load %arg7[%c0_16, %c0_17] : memref<64x256xf32, #tpu.memory_space<vmem>>, vector<64x256xf32>
      tpu.vector_store %arg7[%c0_16, %c0_17], %19 {strides = array<i32>} : memref<64x256xf32, #tpu.memory_space<vmem>>, vector<64x256xf32>,
    } else {
    }
    %c0_i32_1 = arith.constant 0 : i32
    %c256_i32 = arith.constant 256 : i32
    %3 = arith.muli %c0_i32_1, %c256_i32 : i32
    %4 = tpu.assume_multiple %3, 256 : i32
    %c0 = arith.constant 0 : index
    %c0_2 = arith.constant 0 : index
    %5 = arith.index_cast %4 : i32 to index
    %6 = vector.load %arg2[%c0, %c0_2, %5] : memref<1x64x256xf32, #tpu.memory_space<vmem>>, vector<1x64x256xf32>
    %7 = vector.shape_cast %6 : vector<1x64x256xf32> to vector<64x256xf32>
    %c0_3 = arith.constant 0 : index
    %c0_4 = arith.constant 0 : index
    %8 = vector.load %arg6[%c0_3, %c0_4] : memref<64x256xf32, #tpu.memory_space<vmem>>, vector<64x256xf32>
    %9 = arith.addf %8, %7 : vector<64x256xf32>
    %c0_5 = arith.constant 0 : index
    %c0_6 = arith.constant 0 : index
    %10 = vector.load %arg6[%c0_5, %c0_6] : memref<64x256xf32, #tpu.memory_space<vmem>>, vector<64x256xf32>
    tpu.vector_store %arg6[%c0_5, %c0_6], %9 {strides = array<i32>} : memref<64x256xf32, #tpu.memory_space<vmem>>, vector<64x256xf32>,
    %c0_7 = arith.constant 0 : index
    %c0_8 = arith.constant 0 : index
    %11 = vector.load %arg7[%c0_7, %c0_8] : memref<64x256xf32, #tpu.memory_space<vmem>>, vector<64x256xf32>
    %12 = arith.maximumf %11, %7 : vector<64x256xf32>
    %c0_9 = arith.constant 0 : index
    %c0_10 = arith.constant 0 : index
    %13 = vector.load %arg7[%c0_9, %c0_10] : memref<64x256xf32, #tpu.memory_space<vmem>>, vector<64x256xf32>
    tpu.vector_store %arg7[%c0_9, %c0_10], %12 {strides = array<i32>} : memref<64x256xf32, #tpu.memory_space<vmem>>, vector<64x256xf32>,
    %c1_i32 = arith.constant 1 : i32
    %c0_i32_11 = arith.constant 0 : i32
    %14 = arith.cmpi eq, %arg1, %c0_i32_11 : i32
    %15 = arith.extui %14 : i1 to i32
    %c0_i32_12 = arith.constant 0 : i32
    %16 = arith.cmpi ne, %15, %c0_i32_12 : i32
    scf.if %16 {
      %c0_13 = arith.constant 0 : index
      %c0_14 = arith.constant 0 : index
      %17 = vector.load %arg6[%c0_13, %c0_14] : memref<64x256xf32, #tpu.memory_space<vmem>>, vector<64x256xf32>
      %cst = arith.constant dense<0.000000e+00> : vector<64xf32>
      %18 = vector.multi_reduction <add>, %17, %cst [1] : vector<64x256xf32> to vector<64xf32>
      %19 = vector.shape_cast %18 : vector<64xf32> to vector<64x1xf32>
      %cst_15 = arith.constant 3.906250e-03 : f32
      %20 = vector.broadcast %cst_15 : f32 to vector<64x1xf32>
      %21 = arith.mulf %19, %20 : vector<64x1xf32>
      %c0_16 = arith.constant 0 : index
      %c0_17 = arith.constant 0 : index
      %22 = vector.load %arg7[%c0_16, %c0_17] : memref<64x256xf32, #tpu.memory_space<vmem>>, vector<64x256xf32>
      %cst_18 = arith.constant dense<0xFF800000> : vector<64xf32>
      %23 = vector.multi_reduction <maximumf>, %22, %cst_18 [1] : vector<64x256xf32> to vector<64xf32>
      %24 = vector.shape_cast %23 : vector<64xf32> to vector<64x1xf32>
      %25 = tpu.concatenate %21, %24 in 1 : vector<64x1xf32>, vector<64x1xf32> -> vector<64x2xf32>
      %c0_19 = arith.constant 0 : index
      %c0_20 = arith.constant 0 : index
      %26 = vector.load %arg3[%c0_19, %c0_20] : memref<64x4xf32, #tpu.memory_space<vmem>>, vector<64x4xf32>
      %cst_21 = arith.constant dense<0.000000e+00> : vector<4x2xf32>
      %27 = tpu.matmul %26, %25, %cst_21 {dimension_numbers = #tpu.dot_dimension_numbers<[0], [0], [1], [1], [0, 1, 1, 1], [], []>} : vector<64x4xf32>, vector<64x2xf32>, vector<4x2xf32> -> vector<4x2xf32>
      %cst_22 = arith.constant 0.000000e+00 : f32
      %28 = vector.broadcast %cst_22 : f32 to vector<4x2xf32>
      %29 = arith.maximumf %27, %28 : vector<4x2xf32>
      %c0_23 = arith.constant 0 : index
      %c0_24 = arith.constant 0 : index
      %30 = vector.load %arg4[%c0_23, %c0_24] : memref<4x64xf32, #tpu.memory_space<vmem>>, vector<4x64xf32>
      %cst_25 = arith.constant dense<0.000000e+00> : vector<64x2xf32>
      %31 = tpu.matmul %30, %29, %cst_25 {dimension_numbers = #tpu.dot_dimension_numbers<[0], [0], [1], [1], [0, 1, 1, 1], [], []>} : vector<4x64xf32>, vector<4x2xf32>, vector<64x2xf32> -> vector<64x2xf32>
      %32 = vector.extract_strided_slice %31 {offsets = [0, 0], sizes = [64, 1], strides = [1, 1]} : vector<64x2xf32> to vector<64x1xf32>
      %33 = vector.extract_strided_slice %31 {offsets = [0, 1], sizes = [64, 1], strides = [1, 1]} : vector<64x2xf32> to vector<64x1xf32>
      %34 = arith.addf %32, %33 : vector<64x1xf32>
      %35 = arith.negf %34 : vector<64x1xf32>
      %36 = math.exp %35 : vector<64x1xf32>
      %cst_26 = arith.constant 1.000000e+00 : f32
      %37 = vector.broadcast %cst_26 : f32 to vector<64x1xf32>
      %38 = arith.addf %37, %36 : vector<64x1xf32>
      %39 = arith.divf %37, %38 : vector<64x1xf32>
      %c0_27 = arith.constant 0 : index
      %c0_28 = arith.constant 0 : index
      %c0_29 = arith.constant 0 : index
      %40 = vector.load %arg5[%c0_27, %c0_28, %c0_29] : memref<1x64x1xf32, #tpu.memory_space<vmem>>, vector<1x64x1xf32>
      %41 = vector.shape_cast %40 : vector<1x64x1xf32> to vector<64x1xf32>
      %42 = vector.shape_cast %39 : vector<64x1xf32> to vector<1x64x1xf32>
      tpu.vector_store %arg5[%c0_27, %c0_28, %c0_29], %42 {strides = array<i32>} : memref<1x64x1xf32, #tpu.memory_space<vmem>>, vector<1x64x1xf32>,
    } else {
    }
    return
  }
  func.func @transform_0(%arg0: i32, %arg1: i32) -> (i32, i32, i32) {
    %c0_i32 = arith.constant 0 : i32
    %c0_i32_0 = arith.constant 0 : i32
    return %arg0, %c0_i32, %arg1 : i32, i32, i32
  }
  func.func @transform_1(%arg0: i32, %arg1: i32) -> (i32, i32) {
    %c0_i32 = arith.constant 0 : i32
    %c0_i32_0 = arith.constant 0 : i32
    %c0_i32_1 = arith.constant 0 : i32
    return %c0_i32, %c0_i32_0 : i32, i32
  }
  func.func @transform_2(%arg0: i32, %arg1: i32) -> (i32, i32) {
    %c0_i32 = arith.constant 0 : i32
    %c0_i32_0 = arith.constant 0 : i32
    %c0_i32_1 = arith.constant 0 : i32
    return %c0_i32, %c0_i32_0 : i32, i32
  }
  func.func @transform_3(%arg0: i32, %arg1: i32) -> (i32, i32, i32) {
    %c0_i32 = arith.constant 0 : i32
    %c0_i32_0 = arith.constant 0 : i32
    %c0_i32_1 = arith.constant 0 : i32
    return %arg0, %c0_i32, %c0_i32_0 : i32, i32, i32
  }
}

</mosaic_0001>

<llo_original>
// kernel: tpu_custom_call.1
$region0: #{tpu_custom_call.1}
  #allocation0 [shape = 'u32[]', space=smem, size = 0x4, offset = 0x4, fixed_abs, tag = 'smem constant byte address 0x4 - core index']
  #allocation1 [shape = 'u32[72,128]{1,0:T(1,128)}', space=vmem, size = 0x9000, scoped, tag = 'internal scratch']
  #allocation2 [shape = 'f32[64,256]{1,0:T(8,128)}', space=vmem, size = 0x10000, scoped, tag = 'scratch operand']
  #allocation3 [shape = 'f32[64,256]{1,0:T(8,128)}', space=vmem, size = 0x10000, scoped, tag = 'scratch operand']
  %s0 = inlined_call_operand.hbm [shape: f32[2,64,256], index: 0, kind: input, shape index: {}]
  %s1 = inlined_call_operand.vmem [shape: f32[64,4], index: 1, kind: input, shape index: {}]
  %s2 = inlined_call_operand.vmem [shape: f32[4,64], index: 2, kind: input, shape index: {}]
  %s3 = inlined_call_operand.vmem [shape: f32[2,64,1], index: 3, kind: output, shape index: {}]
  %s4 = sld [smem:[#allocation0]]
  $region57: #{tpu_custom_call.1} parent=0
    _
  %s6 = ssub.s32 1, %s4
  %s7 = scalar_select 0, %s6, %s4
  $region1: #{tpu_custom_call.1} parent=0
    #allocation4 [shape = 'u8[131072]{0}', space=vmem, size = 0x20000, scoped, tag = 'input window, operand 0']
    #allocation5 [shape = 's32[2]{0}', space=sflag, size = 0x8, scoped, tag = 'scoped memory for tpu_custom_call.1']
    %8 = vsyncpa [#allocation5], 0
    %s9 = scalar_lea.sflag [#allocation5], 1
    %10 = vsyncpa %s9, 0
    loop: start=0, step=1, limit=4
    $region2: #{tpu_custom_call.1} parent=1 // loop_pre_header
      _
    $region3: #{tpu_custom_call.1} parent=1 // loop_header
      %s12 = sphi 0, %s16
      %p13 = scmp.ge.s32.totalorder %s12, 4
      %s19 = sphi 0, %s31
      %s20 = sphi 0, %s27
      %s21 = sphi 0, %s19
      %s22 = sphi 0, %s20
      %s23 = sphi 0, %s21
      %s24 = sphi 0, %s22
      %s36 = sphi 0, %s38
      %s39 = sphi 0, %s36
      %s40 = sphi 0, %s39
      %s56 = sphi 0, %s40
      %s60 = sphi 0, %s60
      %s62 = sphi 0, %s60
      %s63 = sphi 0, %s62
      %s77 = sphi 0, %s63
      %s81 = sphi 0, %s81
      %s83 = sphi 0, %s81
      %s84 = sphi 0, %s83
      %s98 = sphi 0, %s84
      %s104 = sphi 0, %s106
      %s107 = sphi 0, %s104
      %s108 = sphi 0, %s107
      %s124 = sphi 0, %s108
    $region4: #{tpu_custom_call.1} parent=1 // loop_header_branch
      %15 = sbr.rel (%p13) target = $region8
    $region5: #{tpu_custom_call.1} parent=1 // loop_body
      %s17 = ssub.s32 %s12, 1
      %s18 = ssub.s32 %s12, 2
      %s25 = sadd.s32 1, %s20
      %p26 = scmp.ge.s32.totalorder %s25, 1
      %s27 = scalar_select %p26, 0, %s25
      %s28 = sadd.s32 1, %s19
      %s29 = scalar_select %p26, %s28, %s19
      %p30 = scmp.ge.s32.totalorder %s29, 2
      %s31 = scalar_select %p30, 0, %s29
      %s32 = ssub.s32 %s19, %s31
      %s33 = ssub.s32 %s20, %s27
      %s34 = sor.u32 %s32, %s33
      %p35 = scmp.eq.s32.totalorder %s34, 0
      %s37 = sadd.s32 %s36, 1
      %s38 = scalar_select %p35, %s36, %s37
      %p41 = pneg %p35
      %p42 = scmp.eq.s32.totalorder %s12, 1
      %p43 = por %p41, %p42
      %p44 = scmp.ne.s32.totalorder %s36, %s39
      %p45 = scmp.eq.s32.totalorder %s12, 0
      %p46 = por %p44, %p45
      %p47 = scmp.ne.s32.totalorder %s36, %s39
      %p48 = scmp.eq.s32.totalorder %s17, 1
      %p49 = por %p47, %p48
      %p50 = scmp.ne.s32.totalorder %s39, %s40
      %p51 = scmp.eq.s32.totalorder %s17, 0
      %p52 = por %p50, %p51
      %p53 = scmp.ne.s32.totalorder %s39, %s40
      %p54 = scmp.eq.s32.totalorder %s18, 1
      %p55 = por %p53, %p54
      %p57 = scmp.ne.s32.totalorder %s40, %s56
      %p58 = scmp.eq.s32.totalorder %s18, 0
      %p59 = por %p57, %p58
      %s61 = sadd.s32 %s60, 1
      %p64 = scmp.eq.s32.totalorder %s12, 1
      %p65 = scmp.ne.s32.totalorder %s60, %s62
      %p66 = scmp.eq.s32.totalorder %s12, 0
      %p67 = por %p65, %p66
      %p68 = scmp.ne.s32.totalorder %s60, %s62
      %p69 = scmp.eq.s32.totalorder %s17, 1
      %p70 = por %p68, %p69
      %p71 = scmp.ne.s32.totalorder %s62, %s63
      %p72 = scmp.eq.s32.totalorder %s17, 0
      %p73 = por %p71, %p72
      %p74 = scmp.ne.s32.totalorder %s62, %s63
      %p75 = scmp.eq.s32.totalorder %s18, 1
      %p76 = por %p74, %p75
      %p78 = scmp.ne.s32.totalorder %s63, %s77
      %p79 = scmp.eq.s32.totalorder %s18, 0
      %p80 = por %p78, %p79
      %s82 = sadd.s32 %s81, 1
      %p85 = scmp.eq.s32.totalorder %s12, 1
      %p86 = scmp.ne.s32.totalorder %s81, %s83
      %p87 = scmp.eq.s32.totalorder %s12, 0
      %p88 = por %p86, %p87
      %p89 = scmp.ne.s32.totalorder %s81, %s83
      %p90 = scmp.eq.s32.totalorder %s17, 1
      %p91 = por %p89, %p90
      %p92 = scmp.ne.s32.totalorder %s83, %s84
      %p93 = scmp.eq.s32.totalorder %s17, 0
      %p94 = por %p92, %p93
      %p95 = scmp.ne.s32.totalorder %s83, %s84
      %p96 = scmp.eq.s32.totalorder %s18, 1
      %p97 = por %p95, %p96
      %p99 = scmp.ne.s32.totalorder %s84, %s98
      %p100 = scmp.eq.s32.totalorder %s18, 0
      %p101 = por %p99, %p100
      %s102 = ssub.s32 %s19, %s31
      %p103 = scmp.eq.s32.totalorder %s102, 0
      %s105 = sadd.s32 %s104, 1
      %s106 = scalar_select %p103, %s104, %s105
      %p109 = pneg %p103
      %p110 = scmp.eq.s32.totalorder %s12, 1
      %p111 = por %p109, %p110
      %p112 = scmp.ne.s32.totalorder %s104, %s107
      %p113 = scmp.eq.s32.totalorder %s12, 0
      %p114 = por %p112, %p113
      %p115 = scmp.ne.s32.totalorder %s104, %s107
      %p116 = scmp.eq.s32.totalorder %s17, 1
      %p117 = por %p115, %p116
      %p118 = scmp.ne.s32.totalorder %s107, %s108
      %p119 = scmp.eq.s32.totalorder %s17, 0
      %p120 = por %p118, %p119
      %p121 = scmp.ne.s32.totalorder %s107, %s108
      %p122 = scmp.eq.s32.totalorder %s18, 1
      %p123 = por %p121, %p122
      %p125 = scmp.ne.s32.totalorder %s108, %s124
      %p126 = scmp.eq.s32.totalorder %s18, 0
      %p127 = por %p125, %p126
      %p128 = scmp.le.s32.totalorder 1, %s12
      %p129 = scmp.lt.s32.totalorder %s12, 3
      %p130 = pnand %p128, %p129
      %p131 = pneg %p130
      // Predicated region
      $region9: #{tpu_custom_call.1} parent=5 // pred_check
        _
      $region10: #{tpu_custom_call.1} parent=5 // pred_check_branch
        %133 = sbr.rel (%p130) target = $region12
      $region11: #{tpu_custom_call.1} parent=5 // pred_region
        %s134 = ssub.s32 %s12, 1
        // Predicated region
        $region13: #{tpu_custom_call.1} parent=11 // pred_check
          %p135 = pneg %p73
        $region14: #{tpu_custom_call.1} parent=11 // pred_check_branch
          %137 = sbr.rel (%p135) target = $region16
        $region15: #{tpu_custom_call.1} parent=11 // pred_region
          _
        $region16: #{tpu_custom_call.1} parent=11 // pred_fallthru
          _
        // Predicated region
        $region17: #{tpu_custom_call.1} parent=11 // pred_check
          %p138 = pneg %p94
        $region18: #{tpu_custom_call.1} parent=11 // pred_check_branch
          %140 = sbr.rel (%p138) target = $region20
        $region19: #{tpu_custom_call.1} parent=11 // pred_region
          _
        $region20: #{tpu_custom_call.1} parent=11 // pred_fallthru
          _
      $region12: #{tpu_custom_call.1} parent=5 // pred_fallthru
        _
      %p141 = scmp.lt.s32.totalorder %s12, 2
      // Predicated region
      $region21: #{tpu_custom_call.1} parent=5 // pred_check
        %p142 = pneg %p141
      $region22: #{tpu_custom_call.1} parent=5 // pred_check_branch
        %144 = sbr.rel (%p142) target = $region24
      $region23: #{tpu_custom_call.1} parent=5 // pred_region
        // Predicated region
        $region25: #{tpu_custom_call.1} parent=23 // pred_check
          %p145 = pneg %p46
        $region26: #{tpu_custom_call.1} parent=23 // pred_check_branch
          %147 = sbr.rel (%p145) target = $region28
        $region27: #{tpu_custom_call.1} parent=23 // pred_region
          %s148 = sand.u32 %s36, 1
          %s149 = scalar_lea.sflag [#allocation5], %s148
          %s150 = sand.u32 %s36, 1
          %s151 = smul.addr %s150, 128
          %s152 = scalar_lea.vmem [#allocation4], %s151
          %s153 = smul.u32 2, %s20
          %155 = vsyncadd %s149, 0
          %s156 = smul.addr %s19, 16
          %s157 = sadd.s32 %s153, %s156
          %s158 = smul.addr %s157, 8
          %s159 = scalar_lea.hbm %s0, %s158
          %s160 = sshll.u32 %s159, 4
          %s161 = int_to_ptr.hbm [resolvable:$true] %s160
          %s162 = sshll.u32 %s152, 4
          %s163 = int_to_ptr.vmem [resolvable:$true] %s162
          %168 = dma.hbm_to_vmem [thread:$0]  %s161, 2048, %s163, %s149, 256, 256, 16
        $region28: #{tpu_custom_call.1} parent=23 // pred_fallthru
          _
      $region24: #{tpu_custom_call.1} parent=5 // pred_fallthru
        _
      %p169 = scmp.le.s32.totalorder 1, %s12
      %p170 = scmp.lt.s32.totalorder %s12, 3
      %p171 = pnand %p169, %p170
      %p172 = pneg %p171
      // Predicated region
      $region29: #{tpu_custom_call.1} parent=5 // pred_check
        _
      $region30: #{tpu_custom_call.1} parent=5 // pred_check_branch
        %174 = sbr.rel (%p171) target = $region32
      $region31: #{tpu_custom_call.1} parent=5 // pred_region
        %s175 = ssub.s32 %s12, 1
        %s176 = sand.u32 %s39, 1
        %s177 = scalar_lea.sflag [#allocation5], %s176
        %s178 = sand.u32 %s39, 1
        %s179 = smul.addr %s178, 128
        %s180 = scalar_lea.vmem [#allocation4], %s179
        // Predicated region
        $region33: #{tpu_custom_call.1} parent=31 // pred_check
          %p181 = pneg %p52
        $region34: #{tpu_custom_call.1} parent=31 // pred_check_branch
          %183 = sbr.rel (%p181) target = $region36
        $region35: #{tpu_custom_call.1} parent=31 // pred_region
          %185 = dma.done %s177, 2048
        $region36: #{tpu_custom_call.1} parent=31 // pred_fallthru
          _
        %s186 = sand.u32 %s39, 1
        %s187 = scalar_lea.sflag [#allocation5], %s186
        %s188 = sand.u32 %s39, 1
        %s189 = smul.addr %s188, 128
        %s190 = scalar_lea.vmem [#allocation4], %s189
        %p191 = pneg %p52
        %p192 = pneg %p49
        %p193 = pneg %p73
        %p194 = pneg %p70
        %p195 = pneg %p94
        %p196 = pneg %p91
        %p197 = pneg %p120
        %p198 = pneg %p117
        %p199 = scmp.lt.s32.totalorder %s21, 1
        %s200 = scalar_select %p199, %s21, 1
        %s201 = smul.addr %s200, 8
        %s202 = smul.addr %s201, 8
        %s203 = scalar_lea.vmem %s3, %s202
        %s204 = smul.u32 2, %s22
        %p205 = scmp.lt.s32.totalorder %s21, 1
        %s206 = scalar_select %p205, %s21, 1
        %s207 = smul.addr %s206, 8
        %s208 = smul.addr %s207, 8
        %s209 = scalar_lea.vmem %s3, %s208
        %p210 = scmp.eq.s32.totalorder %s22, 0
        // Predicated region
        $region37: #{tpu_custom_call.1} parent=31 // pred_check
          %p211 = pneg %p210
        $region38: #{tpu_custom_call.1} parent=31 // pred_check_branch
          %213 = sbr.rel (%p211) target = $region40
        $region39: #{tpu_custom_call.1} parent=31 // pred_region
          %214 = vst [vmem:[#allocation2] sm:$0xff] 0.0
          %215 = vst [vmem:[#allocation2 + $0x8] sm:$0xff] 0.0
          %216 = vst [vmem:[#allocation2 + $0x10] sm:$0xff] 0.0
          %217 = vst [vmem:[#allocation2 + $0x18] sm:$0xff] 0.0
          %218 = vst [vmem:[#allocation2 + $0x20] sm:$0xff] 0.0
          %219 = vst [vmem:[#allocation2 + $0x28] sm:$0xff] 0.0
          %220 = vst [vmem:[#allocation2 + $0x30] sm:$0xff] 0.0
          %221 = vst [vmem:[#allocation2 + $0x38] sm:$0xff] 0.0
          %222 = vst [vmem:[#allocation2 + $0x40] sm:$0xff] 0.0
          %223 = vst [vmem:[#allocation2 + $0x48] sm:$0xff] 0.0
          %224 = vst [vmem:[#allocation2 + $0x50] sm:$0xff] 0.0
          %225 = vst [vmem:[#allocation2 + $0x58] sm:$0xff] 0.0
          %226 = vst [vmem:[#allocation2 + $0x60] sm:$0xff] 0.0
          %227 = vst [vmem:[#allocation2 + $0x68] sm:$0xff] 0.0
          %228 = vst [vmem:[#allocation2 + $0x70] sm:$0xff] 0.0
          %229 = vst [vmem:[#allocation2 + $0x78] sm:$0xff] 0.0
          %230 = vst [vmem:[#allocation3] sm:$0xff] -inf
          %231 = vst [vmem:[#allocation3 + $0x8] sm:$0xff] -inf
          %232 = vst [vmem:[#allocation3 + $0x10] sm:$0xff] -inf
          %233 = vst [vmem:[#allocation3 + $0x18] sm:$0xff] -inf
          %234 = vst [vmem:[#allocation3 + $0x20] sm:$0xff] -inf
          %235 = vst [vmem:[#allocation3 + $0x28] sm:$0xff] -inf
          %236 = vst [vmem:[#allocation3 + $0x30] sm:$0xff] -inf
          %237 = vst [vmem:[#allocation3 + $0x38] sm:$0xff] -inf
          %238 = vst [vmem:[#allocation3 + $0x40] sm:$0xff] -inf
          %239 = vst [vmem:[#allocation3 + $0x48] sm:$0xff] -inf
          %240 = vst [vmem:[#allocation3 + $0x50] sm:$0xff] -inf
          %241 = vst [vmem:[#allocation3 + $0x58] sm:$0xff] -inf
          %242 = vst [vmem:[#allocation3 + $0x60] sm:$0xff] -inf
          %243 = vst [vmem:[#allocation3 + $0x68] sm:$0xff] -inf
          %244 = vst [vmem:[#allocation3 + $0x70] sm:$0xff] -inf
          %245 = vst [vmem:[#allocation3 + $0x78] sm:$0xff] -inf
        $region40: #{tpu_custom_call.1} parent=31 // pred_fallthru
          _
        %v246 = vld [vmem:[%s180] sm:$0xff]
        %v247 = vld [vmem:[%s180 + $0x8] sm:$0xff]
        %v248 = vld [vmem:[%s180 + $0x10] sm:$0xff]
        %v249 = vld [vmem:[%s180 + $0x18] sm:$0xff]
        %v250 = vld [vmem:[%s180 + $0x20] sm:$0xff]
        %v251 = vld [vmem:[%s180 + $0x28] sm:$0xff]
        %v252 = vld [vmem:[%s180 + $0x30] sm:$0xff]
        %v253 = vld [vmem:[%s180 + $0x38] sm:$0xff]
        %v254 = vld [vmem:[%s180 + $0x40] sm:$0xff]
        %v255 = vld [vmem:[%s180 + $0x48] sm:$0xff]
        %v256 = vld [vmem:[%s180 + $0x50] sm:$0xff]
        %v257 = vld [vmem:[%s180 + $0x58] sm:$0xff]
        %v258 = vld [vmem:[%s180 + $0x60] sm:$0xff]
        %v259 = vld [vmem:[%s180 + $0x68] sm:$0xff]
        %v260 = vld [vmem:[%s180 + $0x70] sm:$0xff]
        %v261 = vld [vmem:[%s180 + $0x78] sm:$0xff]
        %v262 = vld [vmem:[#allocation2] sm:$0xff]
        %v263 = vld [vmem:[#allocation2 + $0x8] sm:$0xff]
        %v264 = vld [vmem:[#allocation2 + $0x10] sm:$0xff]
        %v265 = vld [vmem:[#allocation2 + $0x18] sm:$0xff]
        %v266 = vld [vmem:[#allocation2 + $0x20] sm:$0xff]
        %v267 = vld [vmem:[#allocation2 + $0x28] sm:$0xff]
        %v268 = vld [vmem:[#allocation2 + $0x30] sm:$0xff]
        %v269 = vld [vmem:[#allocation2 + $0x38] sm:$0xff]
        %v270 = vld [vmem:[#allocation2 + $0x40] sm:$0xff]
        %v271 = vld [vmem:[#allocation2 + $0x48] sm:$0xff]
        %v272 = vld [vmem:[#allocation2 + $0x50] sm:$0xff]
        %v273 = vld [vmem:[#allocation2 + $0x58] sm:$0xff]
        %v274 = vld [vmem:[#allocation2 + $0x60] sm:$0xff]
        %v275 = vld [vmem:[#allocation2 + $0x68] sm:$0xff]
        %v276 = vld [vmem:[#allocation2 + $0x70] sm:$0xff]
        %v277 = vld [vmem:[#allocation2 + $0x78] sm:$0xff]
        %v278 = vadd.f32 %v262, %v246
        %v279 = vadd.f32 %v263, %v247
        %v280 = vadd.f32 %v264, %v248
        %v281 = vadd.f32 %v265, %v249
        %v282 = vadd.f32 %v266, %v250
        %v283 = vadd.f32 %v267, %v251
        %v284 = vadd.f32 %v268, %v252
        %v285 = vadd.f32 %v269, %v253
        %v286 = vadd.f32 %v270, %v254
        %v287 = vadd.f32 %v271, %v255
        %v288 = vadd.f32 %v272, %v256
        %v289 = vadd.f32 %v273, %v257
        %v290 = vadd.f32 %v274, %v258
        %v291 = vadd.f32 %v275, %v259
        %v292 = vadd.f32 %v276, %v260
        %v293 = vadd.f32 %v277, %v261
        %294 = vst [vmem:[#allocation2] sm:$0xff] %v278
        %295 = vst [vmem:[#allocation2 + $0x8] sm:$0xff] %v279
        %296 = vst [vmem:[#allocation2 + $0x10] sm:$0xff] %v280
        %297 = vst [vmem:[#allocation2 + $0x18] sm:$0xff] %v281
        %298 = vst [vmem:[#allocation2 + $0x20] sm:$0xff] %v282
        %299 = vst [vmem:[#allocation2 + $0x28] sm:$0xff] %v283
        %300 = vst [vmem:[#allocation2 + $0x30] sm:$0xff] %v284
        %301 = vst [vmem:[#allocation2 + $0x38] sm:$0xff] %v285
        %302 = vst [vmem:[#allocation2 + $0x40] sm:$0xff] %v286
        %303 = vst [vmem:[#allocation2 + $0x48] sm:$0xff] %v287
        %304 = vst [vmem:[#allocation2 + $0x50] sm:$0xff] %v288
        %305 = vst [vmem:[#allocation2 + $0x58] sm:$0xff] %v289
        %306 = vst [vmem:[#allocation2 + $0x60] sm:$0xff] %v290
        %307 = vst [vmem:[#allocation2 + $0x68] sm:$0xff] %v291
        %308 = vst [vmem:[#allocation2 + $0x70] sm:$0xff] %v292
        %309 = vst [vmem:[#allocation2 + $0x78] sm:$0xff] %v293
        %v310 = vld [vmem:[#allocation3] sm:$0xff]
        %v311 = vld [vmem:[#allocation3 + $0x8] sm:$0xff]
        %v312 = vld [vmem:[#allocation3 + $0x10] sm:$0xff]
        %v313 = vld [vmem:[#allocation3 + $0x18] sm:$0xff]
        %v314 = vld [vmem:[#allocation3 + $0x20] sm:$0xff]
        %v315 = vld [vmem:[#allocation3 + $0x28] sm:$0xff]
        %v316 = vld [vmem:[#allocation3 + $0x30] sm:$0xff]
        %v317 = vld [vmem:[#allocation3 + $0x38] sm:$0xff]
        %v318 = vld [vmem:[#allocation3 + $0x40] sm:$0xff]
        %v319 = vld [vmem:[#allocation3 + $0x48] sm:$0xff]
        %v320 = vld [vmem:[#allocation3 + $0x50] sm:$0xff]
        %v321 = vld [vmem:[#allocation3 + $0x58] sm:$0xff]
        %v322 = vld [vmem:[#allocation3 + $0x60] sm:$0xff]
        %v323 = vld [vmem:[#allocation3 + $0x68] sm:$0xff]
        %v324 = vld [vmem:[#allocation3 + $0x70] sm:$0xff]
        %v325 = vld [vmem:[#allocation3 + $0x78] sm:$0xff]
        %v326 = vmax.f32 %v310, %v246
        %v327 = vmax.f32 %v311, %v247
        %v328 = vmax.f32 %v312, %v248
        %v329 = vmax.f32 %v313, %v249
        %v330 = vmax.f32 %v314, %v250
        %v331 = vmax.f32 %v315, %v251
        %v332 = vmax.f32 %v316, %v252
        %v333 = vmax.f32 %v317, %v253
        %v334 = vmax.f32 %v318, %v254
        %v335 = vmax.f32 %v319, %v255
        %v336 = vmax.f32 %v320, %v256
        %v337 = vmax.f32 %v321, %v257
        %v338 = vmax.f32 %v322, %v258
        %v339 = vmax.f32 %v323, %v259
        %v340 = vmax.f32 %v324, %v260
        %v341 = vmax.f32 %v325, %v261
        %342 = vst [vmem:[#allocation3] sm:$0xff] %v326
        %343 = vst [vmem:[#allocation3 + $0x8] sm:$0xff] %v327
        %344 = vst [vmem:[#allocation3 + $0x10] sm:$0xff] %v328
        %345 = vst [vmem:[#allocation3 + $0x18] sm:$0xff] %v329
        %346 = vst [vmem:[#allocation3 + $0x20] sm:$0xff] %v330
        %347 = vst [vmem:[#allocation3 + $0x28] sm:$0xff] %v331
        %348 = vst [vmem:[#allocation3 + $0x30] sm:$0xff] %v332
        %349 = vst [vmem:[#allocation3 + $0x38] sm:$0xff] %v333
        %350 = vst [vmem:[#allocation3 + $0x40] sm:$0xff] %v334
        %351 = vst [vmem:[#allocation3 + $0x48] sm:$0xff] %v335
        %352 = vst [vmem:[#allocation3 + $0x50] sm:$0xff] %v336
        %353 = vst [vmem:[#allocation3 + $0x58] sm:$0xff] %v337
        %354 = vst [vmem:[#allocation3 + $0x60] sm:$0xff] %v338
        %355 = vst [vmem:[#allocation3 + $0x68] sm:$0xff] %v339
        %356 = vst [vmem:[#allocation3 + $0x70] sm:$0xff] %v340
        %357 = vst [vmem:[#allocation3 + $0x78] sm:$0xff] %v341
        // Predicated region
        $region41: #{tpu_custom_call.1} parent=31 // pred_check
          %p358 = pneg %p210
        $region42: #{tpu_custom_call.1} parent=31 // pred_check_branch
          %360 = sbr.rel (%p358) target = $region44
        $region43: #{tpu_custom_call.1} parent=31 // pred_region
          %v361 = vld [vmem:[#allocation2] sm:$0xff]
          %v362 = vld [vmem:[#allocation2 + $0x8] sm:$0xff]
          %v363 = vld [vmem:[#allocation2 + $0x10] sm:$0xff]
          %v364 = vld [vmem:[#allocation2 + $0x18] sm:$0xff]
          %v365 = vld [vmem:[#allocation2 + $0x20] sm:$0xff]
          %v366 = vld [vmem:[#allocation2 + $0x28] sm:$0xff]
          %v367 = vld [vmem:[#allocation2 + $0x30] sm:$0xff]
          %v368 = vld [vmem:[#allocation2 + $0x38] sm:$0xff]
          %v369 = vld [vmem:[#allocation2 + $0x40] sm:$0xff]
          %v370 = vld [vmem:[#allocation2 + $0x48] sm:$0xff]
          %v371 = vld [vmem:[#allocation2 + $0x50] sm:$0xff]
          %v372 = vld [vmem:[#allocation2 + $0x58] sm:$0xff]
          %v373 = vld [vmem:[#allocation2 + $0x60] sm:$0xff]
          %v374 = vld [vmem:[#allocation2 + $0x68] sm:$0xff]
          %v375 = vld [vmem:[#allocation2 + $0x70] sm:$0xff]
          %v376 = vld [vmem:[#allocation2 + $0x78] sm:$0xff]
          %v377 = vadd.f32 %v361, %v362
          %378 = vadd.xlane.f32.xlu0 %v377
          %v379 = vpop.xlane.xlu0 %378
          %v380 = vadd.f32 %v363, %v364
          %381 = vadd.xlane.f32.xlu0 %v380
          %v382 = vpop.xlane.xlu0 %381
          %v383 = vadd.f32 %v365, %v366
          %384 = vadd.xlane.f32.xlu0 %v383
          %v385 = vpop.xlane.xlu0 %384
          %v386 = vadd.f32 %v367, %v368
          %387 = vadd.xlane.f32.xlu0 %v386
          %v388 = vpop.xlane.xlu0 %387
          %v389 = vadd.f32 %v369, %v370
          %390 = vadd.xlane.f32.xlu0 %v389
          %v391 = vpop.xlane.xlu0 %390
          %v392 = vadd.f32 %v371, %v372
          %393 = vadd.xlane.f32.xlu0 %v392
          %v394 = vpop.xlane.xlu0 %393
          %v395 = vadd.f32 %v373, %v374
          %396 = vadd.xlane.f32.xlu0 %v395
          %v397 = vpop.xlane.xlu0 %396
          %v398 = vadd.f32 %v375, %v376
          %399 = vadd.xlane.f32.xlu0 %v398
          %v400 = vpop.xlane.xlu0 %399
          %v401 = vmul.f32 %v379, 0.00390625
          %v402 = vmul.f32 %v382, 0.00390625
          %v403 = vmul.f32 %v385, 0.00390625
          %v404 = vmul.f32 %v388, 0.00390625
          %v405 = vmul.f32 %v391, 0.00390625
          %v406 = vmul.f32 %v394, 0.00390625
          %v407 = vmul.f32 %v397, 0.00390625
          %v408 = vmul.f32 %v400, 0.00390625
          %v409 = vld [vmem:[#allocation3] sm:$0xff]
          %v410 = vld [vmem:[#allocation3 + $0x8] sm:$0xff]
          %v411 = vld [vmem:[#allocation3 + $0x10] sm:$0xff]
          %v412 = vld [vmem:[#allocation3 + $0x18] sm:$0xff]
          %v413 = vld [vmem:[#allocation3 + $0x20] sm:$0xff]
          %v414 = vld [vmem:[#allocation3 + $0x28] sm:$0xff]
          %v415 = vld [vmem:[#allocation3 + $0x30] sm:$0xff]
          %v416 = vld [vmem:[#allocation3 + $0x38] sm:$0xff]
          %v417 = vld [vmem:[#allocation3 + $0x40] sm:$0xff]
          %v418 = vld [vmem:[#allocation3 + $0x48] sm:$0xff]
          %v419 = vld [vmem:[#allocation3 + $0x50] sm:$0xff]
          %v420 = vld [vmem:[#allocation3 + $0x58] sm:$0xff]
          %v421 = vld [vmem:[#allocation3 + $0x60] sm:$0xff]
          %v422 = vld [vmem:[#allocation3 + $0x68] sm:$0xff]
          %v423 = vld [vmem:[#allocation3 + $0x70] sm:$0xff]
          %v424 = vld [vmem:[#allocation3 + $0x78] sm:$0xff]
          %v425 = vmax.f32 %v409, %v410
          %426 = vmax.xlane.f32.xlu0 %v425
          %v427 = vpop.xlane.xlu0 %426
          %v428 = vmax.f32 %v411, %v412
          %429 = vmax.xlane.f32.xlu0 %v428
          %v430 = vpop.xlane.xlu0 %429
          %v431 = vmax.f32 %v413, %v414
          %432 = vmax.xlane.f32.xlu0 %v431
          %v433 = vpop.xlane.xlu0 %432
          %v434 = vmax.f32 %v415, %v416
          %435 = vmax.xlane.f32.xlu0 %v434
          %v436 = vpop.xlane.xlu0 %435
          %v437 = vmax.f32 %v417, %v418
          %438 = vmax.xlane.f32.xlu0 %v437
          %v439 = vpop.xlane.xlu0 %438
          %v440 = vmax.f32 %v419, %v420
          %441 = vmax.xlane.f32.xlu0 %v440
          %v442 = vpop.xlane.xlu0 %441
          %v443 = vmax.f32 %v421, %v422
          %444 = vmax.xlane.f32.xlu0 %v443
          %v445 = vpop.xlane.xlu0 %444
          %v446 = vmax.f32 %v423, %v424
          %447 = vmax.xlane.f32.xlu0 %v446
          %v448 = vpop.xlane.xlu0 %447
          %vm449 = vcmask 7168
          %v450 = vsel %vm449, %v401, %v427
          %v451 = vsel %vm449, %v402, %v430
          %v452 = vsel %vm449, %v403, %v433
          %v453 = vsel %vm449, %v404, %v436
          %v454 = vsel %vm449, %v405, %v439
          %v455 = vsel %vm449, %v406, %v442
          %v456 = vsel %vm449, %v407, %v445
          %v457 = vsel %vm449, %v408, %v448
          %v458 = vld [vmem:[%s1] sm:$0xff]
          %v459 = vld [vmem:[%s1 + $0x8] sm:$0xff]
          %v460 = vld [vmem:[%s1 + $0x10] sm:$0xff]
          %v461 = vld [vmem:[%s1 + $0x18] sm:$0xff]
          %v462 = vld [vmem:[%s1 + $0x20] sm:$0xff]
          %v463 = vld [vmem:[%s1 + $0x28] sm:$0xff]
          %v464 = vld [vmem:[%s1 + $0x30] sm:$0xff]
          %v465 = vld [vmem:[%s1 + $0x38] sm:$0xff]
          %466 = vxpose.xlu0.b32.start [1/16] %v458, 128
          %467 = vxpose.xlu0.b32.cont [2/16] %v459, 128
          %468 = vxpose.xlu0.b32.cont [3/16] %v460, 128
          %469 = vxpose.xlu0.b32.cont [4/16] %v461, 128
          %470 = vxpose.xlu0.b32.cont [5/16] %v462, 128
          %471 = vxpose.xlu0.b32.cont [6/16] %v463, 128
          %472 = vxpose.xlu0.b32.cont [7/16] %v464, 128
          %473 = vxpose.xlu0.b32.cont [8/16] %v465, 128
          %474 = vxpose.xlu0.b32.cont [9/16] 0.0, 128
          %475 = vxpose.xlu0.b32.cont [10/16] 0.0, 128
          %476 = vxpose.xlu0.b32.cont [11/16] 0.0, 128
          %477 = vxpose.xlu0.b32.cont [12/16] 0.0, 128
          %478 = vxpose.xlu0.b32.cont [13/16] 0.0, 128
          %479 = vxpose.xlu0.b32.cont [14/16] 0.0, 128
          %480 = vxpose.xlu0.b32.cont [15/16] 0.0, 128
          %481 = vxpose.xlu0.b32.end [16/16] 0.0, 128
          %v482 = vpop.trf.xlu0
          %v483 = vpop.trf.xlu0
          %v484 = vpop.trf.xlu0
          %v485 = vpop.trf.xlu0
          %v486 = vpop.trf.xlu0
          %v487 = vpop.trf.xlu0
          %v488 = vpop.trf.xlu0
          %v489 = vpop.trf.xlu0
          %v490 = vpop.trf.xlu0
          %v491 = vpop.trf.xlu0
          %v492 = vpop.trf.xlu0
          %v493 = vpop.trf.xlu0
          %v494 = vpop.trf.xlu0
          %v495 = vpop.trf.xlu0
          %v496 = vpop.trf.xlu0
          %v497 = vpop.trf.xlu0
          %vm498 = vcmask 523264
          %v500 = vsel %vm498, %v482, 0
          %502 = vmatpush.msra.mxu0 0.0
          %503 = vmatpush.msra.mxu0 0.0
          %504 = vmatpush.msra.mxu0 0.0
          %505 = vmatpush.msra.mxu0 0.0
          %506 = vmatpush.msra.mxu0 0.0
          %507 = vmatpush.msra.mxu0 0.0
          %508 = vmatpush.msra.mxu0 0.0
          %509 = vmatpush.msra.mxu0 0.0
          %510 = vmatpush.msra.mxu0 %v457
          %511 = vmatpush.msra.mxu0 %v456
          %512 = vmatpush.msra.mxu0 %v455
          %513 = vmatpush.msra.mxu0 %v454
          %514 = vmatpush.msra.mxu0 %v453
          %515 = vmatpush.msra.mxu0 %v452
          %516 = vmatpush.msra.mxu0 %v451
          %517 = vmatpush.msra.mxu0 %v450
          %518 = vmatmul.f32.gmra.mxu0 %v500
          %v519 = vpop.f32.mrf.mxu0
          %v520 = vadd.f32 0.0, %v519
          %521 = vdwg.mxu0
          %v522 = vmax.f32 %v520, 0.0
          %v523 = vld [vmem:[%s2] sm:$0xf]
          %524 = vxpose.xlu0.b32.start [1/16] %v523, 128
          %525 = vxpose.xlu0.b32.cont [2/16] 0.0, 128
          %526 = vxpose.xlu0.b32.cont [3/16] 0.0, 128
          %527 = vxpose.xlu0.b32.cont [4/16] 0.0, 128
          %528 = vxpose.xlu0.b32.cont [5/16] 0.0, 128
          %529 = vxpose.xlu0.b32.cont [6/16] 0.0, 128
          %530 = vxpose.xlu0.b32.cont [7/16] 0.0, 128
          %531 = vxpose.xlu0.b32.cont [8/16] 0.0, 128
          %532 = vxpose.xlu0.b32.cont [9/16] 0.0, 128
          %533 = vxpose.xlu0.b32.cont [10/16] 0.0, 128
          %534 = vxpose.xlu0.b32.cont [11/16] 0.0, 128
          %535 = vxpose.xlu0.b32.cont [12/16] 0.0, 128
          %536 = vxpose.xlu0.b32.cont [13/16] 0.0, 128
          %537 = vxpose.xlu0.b32.cont [14/16] 0.0, 128
          %538 = vxpose.xlu0.b32.cont [15/16] 0.0, 128
          %539 = vxpose.xlu0.b32.end [16/16] 0.0, 128
          %v540 = vpop.trf.xlu0
          %v541 = vpop.trf.xlu0
          %v542 = vpop.trf.xlu0
          %v543 = vpop.trf.xlu0
          %v544 = vpop.trf.xlu0
          %v545 = vpop.trf.xlu0
          %v546 = vpop.trf.xlu0
          %v547 = vpop.trf.xlu0
          %v548 = vpop.trf.xlu0
          %v549 = vpop.trf.xlu0
          %v550 = vpop.trf.xlu0
          %v551 = vpop.trf.xlu0
          %v552 = vpop.trf.xlu0
          %v553 = vpop.trf.xlu0
          %v554 = vpop.trf.xlu0
          %v555 = vpop.trf.xlu0
          %vm556 = vcmask 31744
          %v558 = vsel %vm556, %v540, 0
          %v561 = vsel %vm556, %v541, 0
          %v564 = vsel %vm556, %v542, 0
          %v567 = vsel %vm556, %v543, 0
          %v570 = vsel %vm556, %v544, 0
          %v573 = vsel %vm556, %v545, 0
          %v576 = vsel %vm556, %v546, 0
          %v579 = vsel %vm556, %v547, 0
          %vm581 = vcmask 1043456
          %v583 = vsel %vm581, %v522, 0
          %585 = vmatpush.msra.mxu0 0.0
          %586 = vmatpush.msra.mxu0 0.0
          %587 = vmatpush.msra.mxu0 0.0
          %588 = vmatpush.msra.mxu0 0.0
          %589 = vmatpush.msra.mxu0 0.0
          %590 = vmatpush.msra.mxu0 0.0
          %591 = vmatpush.msra.mxu0 0.0
          %592 = vmatpush.msra.mxu0 0.0
          %593 = vmatpush.msra.mxu0 0.0
          %594 = vmatpush.msra.mxu0 0.0
          %595 = vmatpush.msra.mxu0 0.0
          %596 = vmatpush.msra.mxu0 0.0
          %597 = vmatpush.msra.mxu0 0.0
          %598 = vmatpush.msra.mxu0 0.0
          %599 = vmatpush.msra.mxu0 0.0
          %600 = vmatpush.msra.mxu0 %v583
          %601 = vmatmul.f32.gmra.mxu0 %v558
          %v602 = vpop.f32.mrf.mxu0
          %v603 = vadd.f32 0.0, %v602
          %604 = vmatmul.f32.gmra.mxu0 %v561
          %v605 = vpop.f32.mrf.mxu0
          %v606 = vadd.f32 0.0, %v605
          %607 = vmatmul.f32.gmra.mxu0 %v564
          %v608 = vpop.f32.mrf.mxu0
          %v609 = vadd.f32 0.0, %v608
          %610 = vmatmul.f32.gmra.mxu0 %v567
          %v611 = vpop.f32.mrf.mxu0
          %v612 = vadd.f32 0.0, %v611
          %613 = vmatmul.f32.gmra.mxu0 %v570
          %v614 = vpop.f32.mrf.mxu0
          %v615 = vadd.f32 0.0, %v614
          %616 = vmatmul.f32.gmra.mxu0 %v573
          %v617 = vpop.f32.mrf.mxu0
          %v618 = vadd.f32 0.0, %v617
          %619 = vmatmul.f32.gmra.mxu0 %v576
          %v620 = vpop.f32.mrf.mxu0
          %v621 = vadd.f32 0.0, %v620
          %622 = vmatmul.f32.gmra.mxu0 %v579
          %v623 = vpop.f32.mrf.mxu0
          %v624 = vadd.f32 0.0, %v623
          %625 = vdwg.mxu0
          %634 = vrot.lane.b32.xlu0 %v603, 127
          %v635 = vpop.permute.xlu0 %634
          %636 = vrot.lane.b32.xlu0 %v606, 127
          %v637 = vpop.permute.xlu0 %636
          %638 = vrot.lane.b32.xlu0 %v609, 127
          %v639 = vpop.permute.xlu0 %638
          %640 = vrot.lane.b32.xlu0 %v612, 127
          %v641 = vpop.permute.xlu0 %640
          %642 = vrot.lane.b32.xlu0 %v615, 127
          %v643 = vpop.permute.xlu0 %642
          %644 = vrot.lane.b32.xlu0 %v618, 127
          %v645 = vpop.permute.xlu0 %644
          %646 = vrot.lane.b32.xlu0 %v621, 127
          %v647 = vpop.permute.xlu0 %646
          %648 = vrot.lane.b32.xlu0 %v624, 127
          %v649 = vpop.permute.xlu0 %648
          %v658 = vadd.f32 %v603, %v635
          %v659 = vadd.f32 %v606, %v637
          %v660 = vadd.f32 %v609, %v639
          %v661 = vadd.f32 %v612, %v641
          %v662 = vadd.f32 %v615, %v643
          %v663 = vadd.f32 %v618, %v645
          %v664 = vadd.f32 %v621, %v647
          %v665 = vadd.f32 %v624, %v649
          %v666 = vxor.u32 %v658, 2147483648
          %v667 = vxor.u32 %v659, 2147483648
          %v668 = vxor.u32 %v660, 2147483648
          %v669 = vxor.u32 %v661, 2147483648
          %v670 = vxor.u32 %v662, 2147483648
          %v671 = vxor.u32 %v663, 2147483648
          %v672 = vxor.u32 %v664, 2147483648
          %v673 = vxor.u32 %v665, 2147483648
          %v674 = vmul.f32 %v666, 1.442695
          %v675 = vpow.pop %v674
          %v676 = vmul.f32 %v667, 1.442695
          %v677 = vpow.pop %v676
          %v678 = vmul.f32 %v668, 1.442695
          %v679 = vpow.pop %v678
          %v680 = vmul.f32 %v669, 1.442695
          %v681 = vpow.pop %v680
          %v682 = vmul.f32 %v670, 1.442695
          %v683 = vpow.pop %v682
          %v684 = vmul.f32 %v671, 1.442695
          %v685 = vpow.pop %v684
          %v686 = vmul.f32 %v672, 1.442695
          %v687 = vpow.pop %v686
          %v688 = vmul.f32 %v673, 1.442695
          %v689 = vpow.pop %v688
          %v690 = vadd.f32 %v675, 1.0
          %v691 = vadd.f32 %v677, 1.0
          %v692 = vadd.f32 %v679, 1.0
          %v693 = vadd.f32 %v681, 1.0
          %v694 = vadd.f32 %v683, 1.0
          %v695 = vadd.f32 %v685, 1.0
          %v696 = vadd.f32 %v687, 1.0
          %v697 = vadd.f32 %v689, 1.0
          %v698 = vrcp.pop %v690
          %v699 = vmul.f32 %v690, %v698
          %v700 = vsub.f32 1.0, %v699
          %v701 = vmul.f32 %v698, %v700
          %v702 = vadd.f32 %v698, %v701
          %vm703 = vweird.f32 %v690
          %vm704 = vweird.f32 %v698
          %vm705 = vmor %vm703, %vm704
          %v706 = vsel %vm705, %v698, %v702
          %v707 = vand.u32 2147483647, %v690
          %vm708 = vcmp.eq.f32.partialorder %v707, 8.507059e+37
          %v709 = vand.u32 %v690, 2147483648
          %v710 = vor.u32 1.1754944e-38, %v709
          %v711 = vsel %vm708, %v710, %v706
          %v712 = vmul.f32 1.0, %v711
          %v713 = vrcp.pop %v691
          %v714 = vmul.f32 %v691, %v713
          %v715 = vsub.f32 1.0, %v714
          %v716 = vmul.f32 %v713, %v715
          %v717 = vadd.f32 %v713, %v716
          %vm718 = vweird.f32 %v691
          %vm719 = vweird.f32 %v713
          %vm720 = vmor %vm718, %vm719
          %v721 = vsel %vm720, %v713, %v717
          %v722 = vand.u32 2147483647, %v691
          %vm723 = vcmp.eq.f32.partialorder %v722, 8.507059e+37
          %v724 = vand.u32 %v691, 2147483648
          %v725 = vor.u32 1.1754944e-38, %v724
          %v726 = vsel %vm723, %v725, %v721
          %v727 = vmul.f32 1.0, %v726
          %v728 = vrcp.pop %v692
          %v729 = vmul.f32 %v692, %v728
          %v730 = vsub.f32 1.0, %v729
          %v731 = vmul.f32 %v728, %v730
          %v732 = vadd.f32 %v728, %v731
          %vm733 = vweird.f32 %v692
          %vm734 = vweird.f32 %v728
          %vm735 = vmor %vm733, %vm734
          %v736 = vsel %vm735, %v728, %v732
          %v737 = vand.u32 2147483647, %v692
          %vm738 = vcmp.eq.f32.partialorder %v737, 8.507059e+37
          %v739 = vand.u32 %v692, 2147483648
          %v740 = vor.u32 1.1754944e-38, %v739
          %v741 = vsel %vm738, %v740, %v736
          %v742 = vmul.f32 1.0, %v741
          %v743 = vrcp.pop %v693
          %v744 = vmul.f32 %v693, %v743
          %v745 = vsub.f32 1.0, %v744
          %v746 = vmul.f32 %v743, %v745
          %v747 = vadd.f32 %v743, %v746
          %vm748 = vweird.f32 %v693
          %vm749 = vweird.f32 %v743
          %vm750 = vmor %vm748, %vm749
          %v751 = vsel %vm750, %v743, %v747
          %v752 = vand.u32 2147483647, %v693
          %vm753 = vcmp.eq.f32.partialorder %v752, 8.507059e+37
          %v754 = vand.u32 %v693, 2147483648
          %v755 = vor.u32 1.1754944e-38, %v754
          %v756 = vsel %vm753, %v755, %v751
          %v757 = vmul.f32 1.0, %v756
          %v758 = vrcp.pop %v694
          %v759 = vmul.f32 %v694, %v758
          %v760 = vsub.f32 1.0, %v759
          %v761 = vmul.f32 %v758, %v760
          %v762 = vadd.f32 %v758, %v761
          %vm763 = vweird.f32 %v694
          %vm764 = vweird.f32 %v758
          %vm765 = vmor %vm763, %vm764
          %v766 = vsel %vm765, %v758, %v762
          %v767 = vand.u32 2147483647, %v694
          %vm768 = vcmp.eq.f32.partialorder %v767, 8.507059e+37
          %v769 = vand.u32 %v694, 2147483648
          %v770 = vor.u32 1.1754944e-38, %v769
          %v771 = vsel %vm768, %v770, %v766
          %v772 = vmul.f32 1.0, %v771
          %v773 = vrcp.pop %v695
          %v774 = vmul.f32 %v695, %v773
          %v775 = vsub.f32 1.0, %v774
          %v776 = vmul.f32 %v773, %v775
          %v777 = vadd.f32 %v773, %v776
          %vm778 = vweird.f32 %v695
          %vm779 = vweird.f32 %v773
          %vm780 = vmor %vm778, %vm779
          %v781 = vsel %vm780, %v773, %v777
          %v782 = vand.u32 2147483647, %v695
          %vm783 = vcmp.eq.f32.partialorder %v782, 8.507059e+37
          %v784 = vand.u32 %v695, 2147483648
          %v785 = vor.u32 1.1754944e-38, %v784
          %v786 = vsel %vm783, %v785, %v781
          %v787 = vmul.f32 1.0, %v786
          %v788 = vrcp.pop %v696
          %v789 = vmul.f32 %v696, %v788
          %v790 = vsub.f32 1.0, %v789
          %v791 = vmul.f32 %v788, %v790
          %v792 = vadd.f32 %v788, %v791
          %vm793 = vweird.f32 %v696
          %vm794 = vweird.f32 %v788
          %vm795 = vmor %vm793, %vm794
          %v796 = vsel %vm795, %v788, %v792
          %v797 = vand.u32 2147483647, %v696
          %vm798 = vcmp.eq.f32.partialorder %v797, 8.507059e+37
          %v799 = vand.u32 %v696, 2147483648
          %v800 = vor.u32 1.1754944e-38, %v799
          %v801 = vsel %vm798, %v800, %v796
          %v802 = vmul.f32 1.0, %v801
          %v803 = vrcp.pop %v697
          %v804 = vmul.f32 %v697, %v803
          %v805 = vsub.f32 1.0, %v804
          %v806 = vmul.f32 %v803, %v805
          %v807 = vadd.f32 %v803, %v806
          %vm808 = vweird.f32 %v697
          %vm809 = vweird.f32 %v803
          %vm810 = vmor %vm808, %vm809
          %v811 = vsel %vm810, %v803, %v807
          %v812 = vand.u32 2147483647, %v697
          %vm813 = vcmp.eq.f32.partialorder %v812, 8.507059e+37
          %v814 = vand.u32 %v697, 2147483648
          %v815 = vor.u32 1.1754944e-38, %v814
          %v816 = vsel %vm813, %v815, %v811
          %v817 = vmul.f32 1.0, %v816
          %818 = vst.msk [vmem:[%s209] sm:$0xff] %vm449, %v712
          %819 = vst.msk [vmem:[%s209 + $0x8] sm:$0xff] %vm449, %v727
          %820 = vst.msk [vmem:[%s209 + $0x10] sm:$0xff] %vm449, %v742
          %821 = vst.msk [vmem:[%s209 + $0x18] sm:$0xff] %vm449, %v757
          %822 = vst.msk [vmem:[%s209 + $0x20] sm:$0xff] %vm449, %v772
          %823 = vst.msk [vmem:[%s209 + $0x28] sm:$0xff] %vm449, %v787
          %824 = vst.msk [vmem:[%s209 + $0x30] sm:$0xff] %vm449, %v802
          %825 = vst.msk [vmem:[%s209 + $0x38] sm:$0xff] %vm449, %v817
        $region44: #{tpu_custom_call.1} parent=31 // pred_fallthru
          _
        %p826 = scmp.lt.s32.totalorder %s21, 1
        %s827 = scalar_select %p826, %s21, 1
        %s828 = smul.addr %s827, 8
        %s829 = smul.addr %s828, 8
        %s830 = scalar_lea.vmem %s3, %s829
        // Predicated region
        $region45: #{tpu_custom_call.1} parent=31 // pred_check
          %p831 = pneg %p117
        $region46: #{tpu_custom_call.1} parent=31 // pred_check_branch
          %833 = sbr.rel (%p831) target = $region48
        $region47: #{tpu_custom_call.1} parent=31 // pred_region
          _
        $region48: #{tpu_custom_call.1} parent=31 // pred_fallthru
          _
      $region32: #{tpu_custom_call.1} parent=5 // pred_fallthru
        _
      %p834 = scmp.le.s32.totalorder 2, %s12
      // Predicated region
      $region49: #{tpu_custom_call.1} parent=5 // pred_check
        %p835 = pneg %p834
      $region50: #{tpu_custom_call.1} parent=5 // pred_check_branch
        %837 = sbr.rel (%p835) target = $region52
      $region51: #{tpu_custom_call.1} parent=5 // pred_region
        %s838 = ssub.s32 %s12, 2
        // Predicated region
        $region53: #{tpu_custom_call.1} parent=51 // pred_check
          %p839 = pneg %p123
        $region54: #{tpu_custom_call.1} parent=51 // pred_check_branch
          %841 = sbr.rel (%p839) target = $region56
        $region55: #{tpu_custom_call.1} parent=51 // pred_region
          %p842 = scmp.lt.s32.totalorder %s23, 1
          %s843 = scalar_select %p842, %s23, 1
          %s844 = smul.addr %s843, 8
          %s845 = smul.addr %s844, 8
          %s846 = scalar_lea.vmem %s3, %s845
        $region56: #{tpu_custom_call.1} parent=51 // pred_fallthru
          _
      $region52: #{tpu_custom_call.1} parent=5 // pred_fallthru
        _
    $region6: #{tpu_custom_call.1} parent=1 // loop_footer
      %s16 = sadd.s32 1, %s12
    $region7: #{tpu_custom_call.1} parent=1 // loop_footer_branch
      %11 = sbr.rel target = $region3
    $region8: #{tpu_custom_call.1} parent=1 // loop_exit
      _
    %847 = vsyncpa [#allocation5], 1
    %s848 = scalar_lea.sflag [#allocation5], 1
    %849 = vsyncpa %s848, 1

</llo_original>
